<compile_context>
chip_gen: v6e
topology: v6e:2x2x1
jax: 0.10.0
libtpu: 0.0.40
codegen_flags: <defaults>
</compile_context>

<pallas_src>
import functools
import math

import jax
import jax.numpy as jnp
from jax.experimental import pallas as pl
from jax.experimental.pallas import tpu as pltpu


_VMEM_LIMIT_BYTES = 48 * 1024 * 1024  # headroom below v7x's 64 MiB physical VMEM


# ----------------------------------------------------------------------------
# In-kernel math helpers
# ----------------------------------------------------------------------------
def _erf(x):
    # lax.erf has no Mosaic lowering; Abramowitz & Stegun 7.1.26 (~1.5e-7 abs
    # error, i.e. float32 precision) built from exp only.
    a1, a2, a3, a4, a5 = 0.254829592, -0.284496736, 1.421413741, -1.453152027, 1.061405429
    p = 0.3275911
    sign = jnp.where(x >= 0.0, 1.0, -1.0)
    ax = jnp.abs(x)
    t = 1.0 / (1.0 + p * ax)
    poly = ((((a5 * t + a4) * t + a3) * t + a2) * t + a1) * t
    return sign * (1.0 - poly * jnp.exp(-ax * ax))


def _gelu(x):
    # ESM uses exact GELU: x * 0.5 * (1 + erf(x / sqrt(2)))
    return x * 0.5 * (1.0 + _erf(x * (1.0 / math.sqrt(2.0))))


def _pick_tile(dim, cap, align):
    """Largest tile <= cap that divides `dim` and is `align`-aligned.

    Falls back to the full dimension (always legal for TPU block shapes)."""
    if dim <= cap:
        return dim
    t = (cap // align) * align
    while t >= align:
        if dim % t == 0:
            return t
        t -= align
    return dim


# ----------------------------------------------------------------------------
# Kernel: tiled fused linear  (y = x @ W + b [, gelu] [, + residual])
# grid = (M/tm, N/tn, K/tk), f32 accumulator in VMEM scratch.
# ----------------------------------------------------------------------------
def _linear_kernel(x_ref, w_ref, b_ref, *rest, activation, has_residual):
    if has_residual:
        res_ref, o_ref, acc_ref = rest
    else:
        o_ref, acc_ref = rest
    k = pl.program_id(2)

    @pl.when(k == 0)
    def _():
        acc_ref[...] = jnp.zeros_like(acc_ref)

    acc_ref[...] += jnp.dot(x_ref[...], w_ref[...], preferred_element_type=jnp.float32)

    @pl.when(k == pl.num_programs(2) - 1)
    def _():
        y = acc_ref[...] + b_ref[...]
        if activation == "gelu":
            y = _gelu(y)
        if has_residual:
            y = y + res_ref[...]
        o_ref[...] = y


def linear(x, w, b, *, activation=None, residual=None,
           tm_cap=256, tn_cap=256, tk_cap=512):
    """x: (M, K) f32, w: (K, N) f32, b: (N,) f32 -> (M, N) f32."""
    M, K = x.shape
    N = w.shape[1]
    tm = _pick_tile(M, tm_cap, 8)
    tn = _pick_tile(N, tn_cap, 128)
    tk = _pick_tile(K, tk_cap, 128)
    grid = (M // tm, N // tn, K // tk)

    inputs = [x, w, b.reshape(1, N)]
    in_specs = [
        pl.BlockSpec((tm, tk), lambda i, j, k: (i, k)),
        pl.BlockSpec((tk, tn), lambda i, j, k: (k, j)),
        pl.BlockSpec((1, tn), lambda i, j, k: (0, j)),
    ]
    if residual is not None:
        inputs.append(residual)
        in_specs.append(pl.BlockSpec((tm, tn), lambda i, j, k: (i, j)))

    kernel = functools.partial(
        _linear_kernel, activation=activation, has_residual=residual is not None
    )
    return pl.pallas_call(
        kernel,
        grid=grid,
        in_specs=in_specs,
        out_specs=pl.BlockSpec((tm, tn), lambda i, j, k: (i, j)),
        out_shape=jax.ShapeDtypeStruct((M, N), jnp.float32),
        scratch_shapes=[pltpu.VMEM((tm, tn), jnp.float32)],
        compiler_params=pltpu.CompilerParams(
            dimension_semantics=("parallel", "parallel", "arbitrary"),
            vmem_limit_bytes=_VMEM_LIMIT_BYTES,
        ),
    )(*inputs)


# ----------------------------------------------------------------------------
# Kernel: fused layernorm + linear  (y = LN(x) @ W + b [, gelu])
# The x block carries the full K (= embed) dimension so the LN row statistics
# are exact; grid = (M/tm, N/tn).  LN work hides under the MXU matmul.
# ----------------------------------------------------------------------------
def _ln_linear_kernel(x_ref, g_ref, beta_ref, w_ref, b_ref, o_ref, *, activation, eps):
    x = x_ref[...]
    mu = jnp.mean(x, axis=-1, keepdims=True)
    xc = x - mu
    var = jnp.mean(xc * xc, axis=-1, keepdims=True)
    h = xc * jax.lax.rsqrt(var + eps) * g_ref[...] + beta_ref[...]
    y = jnp.dot(h, w_ref[...], preferred_element_type=jnp.float32) + b_ref[...]
    if activation == "gelu":
        y = _gelu(y)
    o_ref[...] = y


def ln_linear(x, g, beta, w, b, *, activation=None, eps=1e-5,
              tm_cap=256, tn_cap=256):
    """y = LN(x; g, beta) @ w + b, x: (M, K), w: (K, N)."""
    M, K = x.shape
    N = w.shape[1]
    tm = _pick_tile(M, tm_cap, 8)
    tn = _pick_tile(N, tn_cap, 128)
    grid = (M // tm, N // tn)

    return pl.pallas_call(
        functools.partial(_ln_linear_kernel, activation=activation, eps=eps),
        grid=grid,
        in_specs=[
            pl.BlockSpec((tm, K), lambda i, j: (i, 0)),
            pl.BlockSpec((1, K), lambda i, j: (0, 0)),
            pl.BlockSpec((1, K), lambda i, j: (0, 0)),
            pl.BlockSpec((K, tn), lambda i, j: (0, j)),
            pl.BlockSpec((1, tn), lambda i, j: (0, j)),
        ],
        out_specs=pl.BlockSpec((tm, tn), lambda i, j: (i, j)),
        out_shape=jax.ShapeDtypeStruct((M, N), jnp.float32),
        compiler_params=pltpu.CompilerParams(
            dimension_semantics=("parallel", "parallel"),
            vmem_limit_bytes=_VMEM_LIMIT_BYTES,
        ),
    )(x, g.reshape(1, K), beta.reshape(1, K), w, b.reshape(1, N))


# ----------------------------------------------------------------------------
# Kernel: self-attention with RoPE + additive key-padding bias.
# One batch element (all heads) per grid step, operating directly on the fused
# (B, T, 3E) QKV slab so the output block is lane-dense (1, T, E).
# ----------------------------------------------------------------------------
def _attention_kernel(qkv_ref, cos_ref, sin_ref, bias_ref, o_ref, *, num_heads, scale):
    qkv = qkv_ref[0]                      # (T, 3E)
    cos = cos_ref[...]                    # (T, D)
    sin = sin_ref[...]                    # (T, D)
    bias = bias_ref[0]                    # (1, T) additive: 0 / -1e9 on padded keys
    embed = qkv.shape[1] // 3
    head_dim = embed // num_heads

    def rope(x):
        x1 = x[:, : head_dim // 2]
        x2 = x[:, head_dim // 2:]
        return x * cos + jnp.concatenate([-x2, x1], axis=-1) * sin

    outs = []
    for h in range(num_heads):
        lo = h * head_dim
        q = qkv[:, lo:lo + head_dim] * scale          # scale before RoPE (RoPE is linear)
        k = qkv[:, embed + lo:embed + lo + head_dim]
        v = qkv[:, 2 * embed + lo:2 * embed + lo + head_dim]
        q = rope(q)
        k = rope(k)

        s = jax.lax.dot_general(
            q, k, (((1,), (1,)), ((), ())), preferred_element_type=jnp.float32
        )
        s = s + bias                                   # mask key (column) dimension
        s = s - jnp.max(s, axis=-1, keepdims=True)
        p = jnp.exp(s)
        p = p * pl.reciprocal(jnp.sum(p, axis=-1, keepdims=True), approx=True)
        outs.append(jnp.dot(p, v, preferred_element_type=jnp.float32))

    o_ref[0] = jnp.concatenate(outs, axis=-1)          # (T, E) lane-dense store


def attention(qkv, cos, sin, bias, *, num_heads):
    """qkv: (B, T, 3E); cos/sin: (T, D); bias: (B, 1, T) additive -> (B, T, E)."""
    B, T, E3 = qkv.shape
    E = E3 // 3
    D = E // num_heads
    scale = 1.0 / math.sqrt(D)
    return pl.pallas_call(
        functools.partial(_attention_kernel, num_heads=num_heads, scale=scale),
        grid=(B,),
        in_specs=[
            pl.BlockSpec((1, T, E3), lambda b: (b, 0, 0)),
            pl.BlockSpec((T, D), lambda b: (0, 0)),
            pl.BlockSpec((T, D), lambda b: (0, 0)),
            pl.BlockSpec((1, 1, T), lambda b: (b, 0, 0)),
        ],
        out_specs=pl.BlockSpec((1, T, E), lambda b: (b, 0, 0)),
        out_shape=jax.ShapeDtypeStruct((B, T, E), jnp.float32),
        compiler_params=pltpu.CompilerParams(
            dimension_semantics=("parallel",),
            vmem_limit_bytes=_VMEM_LIMIT_BYTES,
        ),
    )(qkv, cos, sin, bias)


# ----------------------------------------------------------------------------
# Model forward (mirrors ProteinBertModel.forward with rope_embedding=True,
# token_dropout=False, emb_layer_norm_before=None, repr_layers=[],
# need_head_weights=False).
# ----------------------------------------------------------------------------
def protein_bert_forward(tokens, params, cfg):
    B, T = tokens.shape
    E = cfg["embed_dim"]
    H = cfg["attention_heads"]
    V = cfg["alphabet_size"]

    padding_mask = tokens == cfg["padding_idx"]                      # (B, T) bool

    # embed_scale = 1; nn.Embedding gather (glue, plain JAX)
    x = params["embed_tokens"][tokens]                               # (B, T, E)
    x = x * (1.0 - padding_mask[..., None].astype(x.dtype))

    # additive key-padding bias: 0 for real keys, -1e9 for padding
    # (numerically identical to -inf masking in f32, without the NaN hazard)
    attn_bias = (padding_mask.astype(jnp.float32) * -1e9).reshape(B, 1, T)

    cos, sin = params["rope_cos"], params["rope_sin"]
    x2 = x.reshape(B * T, E)

    for layer in params["layers"]:
        # --- self-attention block (pre-LN); LN1 fused into the QKV projection ---
        qkv = ln_linear(x2, layer["ln1_g"], layer["ln1_b"], layer["wqkv"], layer["bqkv"])
        a = attention(qkv.reshape(B, T, 3 * E), cos, sin, attn_bias, num_heads=H)
        x2 = linear(a.reshape(B * T, E), layer["wo"], layer["bo"], residual=x2)

        # --- feed-forward block (pre-LN, exact GELU); LN2 fused into FFN-up ---
        h = ln_linear(x2, layer["ln2_g"], layer["ln2_b"], layer["w1"], layer["b1"],
                      activation="gelu")
        x2 = linear(h, layer["w2"], layer["b2"], residual=x2)

    # final layernorm fused into the LM-head dense (dense -> gelu),
    # then LM layernorm fused into the tied-weight output projection.
    h = ln_linear(x2, params["ln_after_g"], params["ln_after_b"],
                  params["lm_dense_w"], params["lm_dense_b"], activation="gelu")
    logits = ln_linear(h, params["lm_ln_g"], params["lm_ln_b"],
                       params["lm_head_w"], params["lm_bias"])
    logits = logits.reshape(B, T, V)

    return {"logits": logits, "representations": {}}


# ----------------------------------------------------------------------------
# Deterministic parameter init (synthetic, not a checkpoint)
# ----------------------------------------------------------------------------
def init_params(key, cfg):
    E = cfg["embed_dim"]
    F = cfg["ffn_embed_dim"]
    V = cfg["alphabet_size"]
    L = cfg["num_layers"]
    H = cfg["attention_heads"]
    D = E // H
    T = cfg["seq_len"]

    keys = iter(jax.random.split(key, 2 + 4 * L))

    def dense(shape):
        return 0.02 * jax.random.normal(next(keys), shape, dtype=jnp.float32)

    embed = dense((V, E))
    # nn.Embedding(padding_idx=...) zeroes the padding row
    embed = embed.at[cfg["padding_idx"]].set(0.0)

    layers = []
    for _ in range(L):
        layers.append(dict(
            ln1_g=jnp.ones((E,), jnp.float32), ln1_b=jnp.zeros((E,), jnp.float32),
            # fused Q|K|V projection: (E, 3E), bias (3E,)
            wqkv=dense((E, 3 * E)), bqkv=jnp.zeros((3 * E,), jnp.float32),
            wo=dense((E, E)), bo=jnp.zeros((E,), jnp.float32),
            ln2_g=jnp.ones((E,), jnp.float32), ln2_b=jnp.zeros((E,), jnp.float32),
            w1=dense((E, F)), b1=jnp.zeros((F,), jnp.float32),
            w2=dense((F, E)), b2=jnp.zeros((E,), jnp.float32),
        ))

    # Rotary embedding tables (ESM RotaryEmbedding), per head dim D
    inv_freq = 1.0 / (10000.0 ** (jnp.arange(0, D, 2, dtype=jnp.float32) / D))
    t = jnp.arange(T, dtype=jnp.float32)
    freqs = jnp.einsum("i,j->ij", t, inv_freq)                # (T, D/2)
    emb = jnp.concatenate([freqs, freqs], axis=-1)            # (T, D)

    return dict(
        embed_tokens=embed,
        lm_head_w=embed.T,        # tied LM head pre-transposed once to (E, V)
        layers=layers,
        ln_after_g=jnp.ones((E,), jnp.float32),
        ln_after_b=jnp.zeros((E,), jnp.float32),
        lm_dense_w=dense((E, E)),
        lm_dense_b=jnp.zeros((E,), jnp.float32),
        lm_ln_g=jnp.ones((E,), jnp.float32),
        lm_ln_b=jnp.zeros((E,), jnp.float32),
        lm_bias=jnp.zeros((V,), jnp.float32),
        rope_cos=jnp.cos(emb),
        rope_sin=jnp.sin(emb),
    )


# ----------------------------------------------------------------------------
if __name__ == "__main__":
    cfg = dict(
        num_layers=2,
        embed_dim=64,
        ffn_embed_dim=128,
        attention_heads=4,
        alphabet_size=16,
        padding_idx=1,
        mask_idx=3,
        cls_idx=0,
        eos_idx=2,
        seq_len=8,
    )

    key = jax.random.PRNGKey(0)
    pkey, tkey = jax.random.split(key)
    params = init_params(pkey, cfg)

    B, T = 2, cfg["seq_len"]
    tokens = jax.random.randint(tkey, (B, T), 4, cfg["alphabet_size"], dtype=jnp.int32)
    tokens = tokens.at[:, 0].set(cfg["cls_idx"])
    tokens = tokens.at[1, -2:].set(cfg["padding_idx"])   # exercise the padding mask

    out = protein_bert_forward(tokens, params, cfg)
    logits = jax.block_until_ready(out["logits"])

    assert logits.shape == (B, T, cfg["alphabet_size"])
    assert logits.dtype == jnp.float32
    assert bool(jnp.all(jnp.isfinite(logits)))
    print("KERNEL_OK")
</pallas_src>

<mosaic_0001>
module attributes {stable_mosaic.version = 11 : i64} {
  func.func @_ln_linear_kernel(%arg0: i32, %arg1: i32, %arg2: memref<16x64xf32, #tpu.memory_space<vmem>>, %arg3: memref<1x64xf32, #tpu.memory_space<vmem>>, %arg4: memref<1x64xf32, #tpu.memory_space<vmem>>, %arg5: memref<64x192xf32, #tpu.memory_space<vmem>>, %arg6: memref<1x192xf32, #tpu.memory_space<vmem>>, %arg7: memref<16x192xf32, #tpu.memory_space<vmem>>) attributes {dimension_semantics = [#tpu.dimension_semantics<parallel>, #tpu.dimension_semantics<parallel>], iteration_bounds = array<i64: 1, 1>, scalar_prefetch = 0 : i64, scratch_operands = 0 : i64, tpu.core_type = #tpu.core_type<tc>, window_params = [{transform_indices = @transform_0, window_bounds = array<i64: 16, 64>}, {pipeline_mode = #tpu.pipeline_mode<synchronous>, transform_indices = @transform_1, window_bounds = array<i64: 1, 64>}, {pipeline_mode = #tpu.pipeline_mode<synchronous>, transform_indices = @transform_2, window_bounds = array<i64: 1, 64>}, {transform_indices = @transform_3, window_bounds = array<i64: 64, 192>}, {transform_indices = @transform_4, window_bounds = array<i64: 1, 192>}, {transform_indices = @transform_5, window_bounds = array<i64: 16, 192>}]} {
    %c0 = arith.constant 0 : index
    %c0_0 = arith.constant 0 : index
    %0 = vector.load %arg2[%c0, %c0_0] : memref<16x64xf32, #tpu.memory_space<vmem>>, vector<16x64xf32>
    %cst = arith.constant dense<0.000000e+00> : vector<16xf32>
    %1 = vector.multi_reduction <add>, %0, %cst [1] : vector<16x64xf32> to vector<16xf32>
    %2 = vector.shape_cast %1 : vector<16xf32> to vector<16x1xf32>
    %cst_1 = arith.constant 6.400000e+01 : f32
    %3 = vector.broadcast %cst_1 : f32 to vector<16x1xf32>
    %4 = arith.divf %2, %3 : vector<16x1xf32>
    %5 = vector.broadcast %4 : vector<16x1xf32> to vector<16x64xf32>
    %6 = arith.subf %0, %5 : vector<16x64xf32>
    %7 = arith.mulf %6, %6 : vector<16x64xf32>
    %cst_2 = arith.constant dense<0.000000e+00> : vector<16xf32>
    %8 = vector.multi_reduction <add>, %7, %cst_2 [1] : vector<16x64xf32> to vector<16xf32>
    %9 = vector.shape_cast %8 : vector<16xf32> to vector<16x1xf32>
    %cst_3 = arith.constant 6.400000e+01 : f32
    %10 = vector.broadcast %cst_3 : f32 to vector<16x1xf32>
    %11 = arith.divf %9, %10 : vector<16x1xf32>
    %cst_4 = arith.constant 9.99999974E-6 : f32
    %12 = vector.broadcast %cst_4 : f32 to vector<16x1xf32>
    %13 = arith.addf %11, %12 : vector<16x1xf32>
    %14 = math.rsqrt %13 : vector<16x1xf32>
    %15 = vector.broadcast %14 : vector<16x1xf32> to vector<16x64xf32>
    %16 = arith.mulf %6, %15 : vector<16x64xf32>
    %c0_5 = arith.constant 0 : index
    %c0_6 = arith.constant 0 : index
    %17 = vector.load %arg3[%c0_5, %c0_6] : memref<1x64xf32, #tpu.memory_space<vmem>>, vector<1x64xf32>
    %18 = vector.broadcast %17 : vector<1x64xf32> to vector<16x64xf32>
    %19 = arith.mulf %16, %18 : vector<16x64xf32>
    %c0_7 = arith.constant 0 : index
    %c0_8 = arith.constant 0 : index
    %20 = vector.load %arg4[%c0_7, %c0_8] : memref<1x64xf32, #tpu.memory_space<vmem>>, vector<1x64xf32>
    %21 = vector.broadcast %20 : vector<1x64xf32> to vector<16x64xf32>
    %22 = arith.addf %19, %21 : vector<16x64xf32>
    %c0_9 = arith.constant 0 : index
    %c0_10 = arith.constant 0 : index
    %23 = vector.load %arg5[%c0_9, %c0_10] : memref<64x192xf32, #tpu.memory_space<vmem>>, vector<64x192xf32>
    %cst_11 = arith.constant dense<0.000000e+00> : vector<16x192xf32>
    %24 = tpu.matmul %22, %23, %cst_11 {dimension_numbers = #tpu.dot_dimension_numbers<[1], [0], [0], [1], [0, 0, 1, 1], [], []>} : vector<16x64xf32>, vector<64x192xf32>, vector<16x192xf32> -> vector<16x192xf32>
    %c0_12 = arith.constant 0 : index
    %c0_13 = arith.constant 0 : index
    %25 = vector.load %arg6[%c0_12, %c0_13] : memref<1x192xf32, #tpu.memory_space<vmem>>, vector<1x192xf32>
    %26 = vector.broadcast %25 : vector<1x192xf32> to vector<16x192xf32>
    %27 = arith.addf %24, %26 : vector<16x192xf32>
    %c0_14 = arith.constant 0 : index
    %c0_15 = arith.constant 0 : index
    %28 = vector.load %arg7[%c0_14, %c0_15] : memref<16x192xf32, #tpu.memory_space<vmem>>, vector<16x192xf32>
    tpu.vector_store %arg7[%c0_14, %c0_15], %27 {strides = array<i32>} : memref<16x192xf32, #tpu.memory_space<vmem>>, vector<16x192xf32>,
    return
  }
  func.func @transform_0(%arg0: i32, %arg1: i32) -> (i32, i32) {
    %c0_i32 = arith.constant 0 : i32
    %c0_i32_0 = arith.constant 0 : i32
    return %arg0, %c0_i32 : i32, i32
  }
  func.func @transform_1(%arg0: i32, %arg1: i32) -> (i32, i32) {
    %c0_i32 = arith.constant 0 : i32
    %c0_i32_0 = arith.constant 0 : i32
    %c0_i32_1 = arith.constant 0 : i32
    return %c0_i32, %c0_i32_0 : i32, i32
  }
  func.func @transform_2(%arg0: i32, %arg1: i32) -> (i32, i32) {
    %c0_i32 = arith.constant 0 : i32
    %c0_i32_0 = arith.constant 0 : i32
    %c0_i32_1 = arith.constant 0 : i32
    return %c0_i32, %c0_i32_0 : i32, i32
  }
  func.func @transform_3(%arg0: i32, %arg1: i32) -> (i32, i32) {
    %c0_i32 = arith.constant 0 : i32
    %c0_i32_0 = arith.constant 0 : i32
    return %c0_i32, %arg1 : i32, i32
  }
  func.func @transform_4(%arg0: i32, %arg1: i32) -> (i32, i32) {
    %c0_i32 = arith.constant 0 : i32
    %c0_i32_0 = arith.constant 0 : i32
    return %c0_i32, %arg1 : i32, i32
  }
  func.func @transform_5(%arg0: i32, %arg1: i32) -> (i32, i32) {
    %c0_i32 = arith.constant 0 : i32
    return %arg0, %arg1 : i32, i32
  }
}

</mosaic_0001>

<llo_original>
// kernel: tpu_custom_call.1
$region0: #{tpu_custom_call.1}
  #allocation0 [shape = 'u32[]', space=smem, size = 0x4, offset = 0x4, fixed_abs, tag = 'smem constant byte address 0x4 - core index']
  #allocation1 [shape = 'u32[144,128]{1,0:T(1,128)}', space=vmem, size = 0x12000, scoped, tag = 'internal scratch']
  %s0 = inlined_call_operand.hbm [shape: f32[16,64], index: 0, kind: input, shape index: {}]
  %s1 = inlined_call_operand.vmem [shape: f32[1,64], index: 1, kind: input, shape index: {}]
  %s2 = inlined_call_operand.hbm [shape: f32[1,64], index: 2, kind: input, shape index: {}]
  %s3 = inlined_call_operand.hbm [shape: f32[64,192], index: 3, kind: input, shape index: {}]
  %s4 = inlined_call_operand.vmem [shape: f32[1,192], index: 4, kind: input, shape index: {}]
  %s5 = inlined_call_operand.hbm [shape: f32[16,192], index: 5, kind: output, shape index: {}]
  %s6 = sld [smem:[#allocation0]]
  $region42: #{tpu_custom_call.1} parent=0
    _
  %s8 = ssub.s32 1, %s6
  %s9 = scalar_select 0, %s8, %s6
  $region1: #{tpu_custom_call.1} parent=0
    #allocation2 [shape = 'u8[8192]{0}', space=vmem, size = 0x2000, scoped, tag = 'input window, operand 0, single buffered']
    #allocation3 [shape = 's32[1]{0}', space=sflag, size = 0x4, scoped, tag = 'scoped memory for tpu_custom_call.1']
    #allocation4 [shape = 's32[1]{0}', space=sflag, size = 0x4, scoped, tag = 'scoped memory for tpu_custom_call.1']
    #allocation5 [shape = 'u8[512]{0}', space=vmem, size = 0x400, scoped, tag = 'input window, operand 2, single buffered']
    #allocation6 [shape = 's32[1]{0}', space=sflag, size = 0x4, scoped, tag = 'scoped memory for tpu_custom_call.1']
    #allocation7 [shape = 'u8[65536]{0}', space=vmem, size = 0x10000, scoped, tag = 'input window, operand 3, single buffered']
    #allocation8 [shape = 'u8[16384]{0}', space=vmem, size = 0x4000, scoped, tag = 'output window, operand 0, single buffered']
    %10 = vsyncpa [#allocation3], 0
    %11 = vsyncpa [#allocation6], 0
    %12 = vsyncpa [#allocation4], 0
    // Predicated region
    $region2: #{tpu_custom_call.1} parent=1 // pred_check
      _
    $region3: #{tpu_custom_call.1} parent=1 // pred_check_branch
      %14 = sbr.rel (0) target = $region5
    $region4: #{tpu_custom_call.1} parent=1 // pred_region
      %s16 = ssub.s32 256, 256
      %17 = vsyncadd [#allocation3], %s16
      %s18 = sshll.u32 [#allocation2], 4
      %s19 = int_to_ptr.vmem [resolvable:$true] %s18
      %24 = dma.hbm_to_vmem [thread:$0]  %s0, 256, %s19, [#allocation3], 128, 128, 8
    $region5: #{tpu_custom_call.1} parent=1 // pred_fallthru
      _
    // Predicated region
    $region6: #{tpu_custom_call.1} parent=1 // pred_check
      _
    $region7: #{tpu_custom_call.1} parent=1 // pred_check_branch
      %26 = sbr.rel (0) target = $region9
    $region8: #{tpu_custom_call.1} parent=1 // pred_region
      _
    $region9: #{tpu_custom_call.1} parent=1 // pred_fallthru
      _
    // Predicated region
    $region10: #{tpu_custom_call.1} parent=1 // pred_check
      _
    $region11: #{tpu_custom_call.1} parent=1 // pred_check_branch
      %28 = sbr.rel (0) target = $region13
    $region12: #{tpu_custom_call.1} parent=1 // pred_region
      %s30 = ssub.s32 16, 16
      %31 = vsyncadd [#allocation6], %s30
      %s33 = sshll.u32 [#allocation5], 4
      %s34 = int_to_ptr.vmem [resolvable:$true] %s33
      %36 = dma.hbm_to_vmem [thread:$0]  %s2, 16, %s34, [#allocation6]
    $region13: #{tpu_custom_call.1} parent=1 // pred_fallthru
      _
    // Predicated region
    $region14: #{tpu_custom_call.1} parent=1 // pred_check
      _
    $region15: #{tpu_custom_call.1} parent=1 // pred_check_branch
      %38 = sbr.rel (0) target = $region17
    $region16: #{tpu_custom_call.1} parent=1 // pred_region
      %s40 = ssub.s32 2048, 2048
      %41 = vsyncadd [#allocation6], %s40
      %s42 = sshll.u32 [#allocation7], 4
      %s43 = int_to_ptr.vmem [resolvable:$true] %s42
      %48 = dma.hbm_to_vmem [thread:$0]  %s3, 2048, %s43, [#allocation6], 256, 256, 16
    $region17: #{tpu_custom_call.1} parent=1 // pred_fallthru
      _
    // Predicated region
    $region18: #{tpu_custom_call.1} parent=1 // pred_check
      _
    $region19: #{tpu_custom_call.1} parent=1 // pred_check_branch
      %50 = sbr.rel (0) target = $region21
    $region20: #{tpu_custom_call.1} parent=1 // pred_region
      _
    $region21: #{tpu_custom_call.1} parent=1 // pred_fallthru
      _
    // Predicated region
    $region22: #{tpu_custom_call.1} parent=1 // pred_check
      _
    $region23: #{tpu_custom_call.1} parent=1 // pred_check_branch
      %52 = sbr.rel (0) target = $region25
    $region24: #{tpu_custom_call.1} parent=1 // pred_region
      %53 = dma.done [#allocation3], 256
    $region25: #{tpu_custom_call.1} parent=1 // pred_fallthru
      _
    // Predicated region
    $region26: #{tpu_custom_call.1} parent=1 // pred_check
      _
    $region27: #{tpu_custom_call.1} parent=1 // pred_check_branch
      %55 = sbr.rel (0) target = $region29
    $region28: #{tpu_custom_call.1} parent=1 // pred_region
      %56 = dma.done [#allocation6], 16
    $region29: #{tpu_custom_call.1} parent=1 // pred_fallthru
      _
    // Predicated region
    $region30: #{tpu_custom_call.1} parent=1 // pred_check
      _
    $region31: #{tpu_custom_call.1} parent=1 // pred_check_branch
      %58 = sbr.rel (0) target = $region33
    $region32: #{tpu_custom_call.1} parent=1 // pred_region
      %59 = dma.done [#allocation6], 2048
    $region33: #{tpu_custom_call.1} parent=1 // pred_fallthru
      _
    %v60 = vld [vmem:[#allocation2] sm:$0xff]
    %v61 = vld [vmem:[#allocation2 + $0x8] sm:$0xff]
    %vm62 = vcmask 523264
    %v63 = vsel %vm62, %v60, 0.0
    %64 = vadd.xlane.f32.xlu0 %v63
    %v65 = vpop.xlane.xlu0 %64
    %v66 = vsel %vm62, %v61, 0.0
    %67 = vadd.xlane.f32.xlu0 %v66
    %v68 = vpop.xlane.xlu0 %67
    %v69 = vrcp.pop 64.0
    %v70 = vmul.f32 %v65, %v69
    %v71 = vmul.f32 %v68, %v69
    %v72 = vsub.f32 %v60, %v70
    %v73 = vsub.f32 %v61, %v71
    %v74 = vmul.f32 %v72, %v72
    %v75 = vmul.f32 %v73, %v73
    %v76 = vsel %vm62, %v74, 0.0
    %77 = vadd.xlane.f32.xlu0 %v76
    %v78 = vpop.xlane.xlu0 %77
    %v79 = vsel %vm62, %v75, 0.0
    %80 = vadd.xlane.f32.xlu0 %v79
    %v81 = vpop.xlane.xlu0 %80
    %v82 = vmul.f32 %v78, %v69
    %v83 = vmul.f32 %v81, %v69
    %v84 = vadd.f32 %v82, 1e-05
    %v85 = vadd.f32 %v83, 1e-05
    %v86 = vrsqrt.pop %v84
    %v87 = vrsqrt.pop %v85
    %v88 = vmul.f32 %v72, %v86
    %v89 = vmul.f32 %v73, %v87
    %v90 = vld [vmem:[%s1] sm:$0x1]
    %v92 = vlaneseq
    %v93 = vshrl.u32 %v92, 7
    %v94 = vsub.s32 0, %v93
    %v95 = vrot.slane %v90, %v94
    %v97 = vmul.f32 %v88, %v95
    %v98 = vmul.f32 %v89, %v95
    %v99 = vld [vmem:[#allocation5] sm:$0x1]
    %v101 = vlaneseq
    %v102 = vshrl.u32 %v101, 7
    %v103 = vsub.s32 0, %v102
    %v104 = vrot.slane %v99, %v103
    %v106 = vadd.f32 %v97, %v104
    %v107 = vadd.f32 %v98, %v104
    %v108 = vld [vmem:[#allocation7] sm:$0xff]
    %v109 = vld [vmem:[#allocation7 + $0x8] sm:$0xff]
    %v110 = vld [vmem:[#allocation7 + $0x10] sm:$0xff]
    %v111 = vld [vmem:[#allocation7 + $0x18] sm:$0xff]
    %v112 = vld [vmem:[#allocation7 + $0x20] sm:$0xff]
    %v113 = vld [vmem:[#allocation7 + $0x28] sm:$0xff]
    %v114 = vld [vmem:[#allocation7 + $0x30] sm:$0xff]
    %v115 = vld [vmem:[#allocation7 + $0x38] sm:$0xff]
    %v116 = vld [vmem:[#allocation7 + $0x40] sm:$0xff]
    %v117 = vld [vmem:[#allocation7 + $0x48] sm:$0xff]
    %v118 = vld [vmem:[#allocation7 + $0x50] sm:$0xff]
    %v119 = vld [vmem:[#allocation7 + $0x58] sm:$0xff]
    %v120 = vld [vmem:[#allocation7 + $0x60] sm:$0xff]
    %v121 = vld [vmem:[#allocation7 + $0x68] sm:$0xff]
    %v122 = vld [vmem:[#allocation7 + $0x70] sm:$0xff]
    %v123 = vld [vmem:[#allocation7 + $0x78] sm:$0xff]
    %v124 = vld [vmem:[%s4] sm:$0x3]
    %v126 = vlaneseq
    %v127 = vshrl.u32 %v126, 7
    %v128 = vsub.s32 0, %v127
    %v129 = vrot.slane %v124, %v128
    %v130 = vlaneseq
    %v131 = vshrl.u32 %v130, 7
    %v132 = vsub.s32 1, %v131
    %v133 = vrot.slane %v124, %v132
    %v137 = vsel %vm62, %v106, 0
    %v140 = vsel %vm62, %v107, 0
    %142 = vmatprep.subr.mxu0 0.0
    %143 = vmatpush1.msra.mxu0 0.0
    %144 = vmatprep.subr.mxu0 0.0
    %145 = vmatpush1.msra.mxu0 0.0
    %146 = vmatprep.subr.mxu0 0.0
    %147 = vmatpush1.msra.mxu0 0.0
    %148 = vmatprep.subr.mxu0 0.0
    %149 = vmatpush1.msra.mxu0 0.0
    %150 = vmatprep.subr.mxu0 0.0
    %151 = vmatpush1.msra.mxu0 0.0
    %152 = vmatprep.subr.mxu0 0.0
    %153 = vmatpush1.msra.mxu0 0.0
    %154 = vmatprep.subr.mxu0 0.0
    %155 = vmatpush1.msra.mxu0 0.0
    %156 = vmatprep.subr.mxu0 0.0
    %157 = vmatpush1.msra.mxu0 0.0
    %158 = vmatprep.subr.mxu0 %v123
    %159 = vmatpush1.msra.mxu0 %v122
    %160 = vmatprep.subr.mxu0 %v121
    %161 = vmatpush1.msra.mxu0 %v120
    %162 = vmatprep.subr.mxu0 %v119
    %163 = vmatpush1.msra.mxu0 %v118
    %164 = vmatprep.subr.mxu0 %v117
    %165 = vmatpush1.msra.mxu0 %v116
    %166 = vmatprep.subr.mxu0 %v115
    %167 = vmatpush1.msra.mxu0 %v114
    %168 = vmatprep.subr.mxu0 %v113
    %169 = vmatpush1.msra.mxu0 %v112
    %170 = vmatprep.subr.mxu0 %v111
    %171 = vmatpush1.msra.mxu0 %v110
    %172 = vmatprep.subr.mxu0 %v109
    %173 = vmatpush1.msra.mxu0 %v108
    %174 = vmatprep.subr.mxu0 0.0
    %175 = vmatpush2.msra.mxu0 0.0
    %176 = vmatprep.subr.mxu0 0.0
    %177 = vmatpush2.msra.mxu0 0.0
    %178 = vmatprep.subr.mxu0 0.0
    %179 = vmatpush2.msra.mxu0 0.0
    %180 = vmatprep.subr.mxu0 0.0
    %181 = vmatpush2.msra.mxu0 0.0
    %182 = vmatprep.subr.mxu0 0.0
    %183 = vmatpush2.msra.mxu0 0.0
    %184 = vmatprep.subr.mxu0 0.0
    %185 = vmatpush2.msra.mxu0 0.0
    %186 = vmatprep.subr.mxu0 0.0
    %187 = vmatpush2.msra.mxu0 0.0
    %188 = vmatprep.subr.mxu0 0.0
    %189 = vmatpush2.msra.mxu0 0.0
    %190 = vmatprep.subr.mxu0 0.0
    %191 = vmatpush2.msra.mxu0 0.0
    %192 = vmatprep.subr.mxu0 0.0
    %193 = vmatpush2.msra.mxu0 0.0
    %194 = vmatprep.subr.mxu0 0.0
    %195 = vmatpush2.msra.mxu0 0.0
    %196 = vmatprep.subr.mxu0 0.0
    %197 = vmatpush2.msra.mxu0 0.0
    %198 = vmatprep.subr.mxu0 0.0
    %199 = vmatpush2.msra.mxu0 0.0
    %200 = vmatprep.subr.mxu0 0.0
    %201 = vmatpush2.msra.mxu0 0.0
    %202 = vmatprep.subr.mxu0 0.0
    %203 = vmatpush2.msra.mxu0 0.0
    %204 = vmatprep.subr.mxu0 0.0
    %205 = vmatpush2.msra.mxu0 0.0
    %206 = vmatprep.mubr.f32.mxu0 0.0
    %207 = vmatmul.mubr.f32.gmra.mxu0 %v137
    %v208 = vpop.f32.mrf.mxu0
    %v209 = vadd.f32 %v129, %v208
    %v210 = vpop.f32.mrf.mxu0
    %v211 = vadd.f32 %v133, %v210
    %212 = vmatprep.mubr.f32.mxu0 0.0
    %213 = vmatmul.mubr.f32.gmra.mxu0 %v140
    %v214 = vpop.f32.mrf.mxu0
    %v215 = vadd.f32 %v129, %v214
    %v216 = vpop.f32.mrf.mxu0
    %v217 = vadd.f32 %v133, %v216
    %218 = vdwg.mxu0
    %219 = vst [vmem:[#allocation8] sm:$0xff] %v209
    %220 = vst.msk [vmem:[#allocation8 + $0x8] sm:$0xff] %vm62, %v211
    %221 = vst [vmem:[#allocation8 + $0x10] sm:$0xff] %v215
    %222 = vst.msk [vmem:[#allocation8 + $0x18] sm:$0xff] %vm62, %v217
    // Predicated region
    $region34: #{tpu_custom_call.1} parent=1 // pred_check
      _
    $region35: #{tpu_custom_call.1} parent=1 // pred_check_branch
      %224 = sbr.rel (0) target = $region37
    $region36: #{tpu_custom_call.1} parent=1 // pred_region
      %s226 = ssub.s32 512, 512
      %227 = vsyncadd [#allocation4], %s226
      %s228 = sshll.u32 [#allocation8], 4
      %s229 = int_to_ptr.vmem [resolvable:$true] %s228
      %234 = dma.vmem_to_hbm [thread:$0]  %s229, 512, %s5, [#allocation4], 256, 256, 16
    $region37: #{tpu_custom_call.1} parent=1 // pred_fallthru
      _
    // Predicated region
    $region38: #{tpu_custom_call.1} parent=1 // pred_check
      _
    $region39: #{tpu_custom_call.1} parent=1 // pred_check_branch
      %236 = sbr.rel (0) target = $region41
    $region40: #{tpu_custom_call.1} parent=1 // pred_region
      %237 = dma.done [#allocation4], 512
    $region41: #{tpu_custom_call.1} parent=1 // pred_fallthru
      _
    %238 = vsyncpa [#allocation3], 1
    %239 = vsyncpa [#allocation6], 1
    %240 = vsyncpa [#allocation4], 1

</llo_original>
